<compile_context>
chip_gen: v7x
topology: tpu7x:2x2x1
jax: 0.10.0
libtpu: 0.0.40
codegen_flags: <defaults>
</compile_context>

<pallas_src>
import jax
import jax.numpy as jnp
from jax.experimental import pallas as pl
from jax.experimental.pallas import tpu as pltpu


def sfp_kernel(y_ref, w1_ref, gamma_ref, beta_ref, w2_ref, b2_ref, out_ref):
    # y_ref: (B, L, C) -- C on the lane axis; sum over L is a sublane reduce.
    z = jnp.sum(y_ref[...], axis=1)                              # (B, C)

    # gate_c_fc_0 : Linear(C -> Cr); scale/L folded into w1, bias cancelled by BN.
    h = jax.lax.dot_general(z, w1_ref[...], (((1,), (0,)), ((), ())),
                            preferred_element_type=jnp.float32)  # (B, Cr)

    # gate_c_bn_1 : BatchNorm1d(Cr), training-mode batch stats, fused into one FMA.
    mu = jnp.mean(h, axis=0, keepdims=True)
    var = jnp.mean((h - mu) ** 2, axis=0, keepdims=True)         # biased
    s = jax.lax.rsqrt(var + 1e-5) * gamma_ref[...]               # (1, Cr)
    t = beta_ref[...] - mu * s                                   # (1, Cr)

    # gate_c_relu_1 fused with the BN epilogue.
    h = jnp.maximum(h * s + t, 0.0)

    # gate_c_fc_final : Linear(Cr -> C)
    out = jax.lax.dot_general(h, w2_ref[...], (((1,), (0,)), ((), ())),
                              preferred_element_type=jnp.float32)  # (B, C)
    out_ref[...] = out + b2_ref[...]


def sfp_forward(y, scale, w1, b1, gamma, beta, w2, b2, levels=3):
    """y: (B, C, L) float32 (PyTorch NCW). Returns (B, C) gate descriptor."""
    B, C, L = y.shape
    # Haar scaled-mean identity requires no symmetric padding at any level.
    assert L % (2 ** levels) == 0, "SFP wavelet identity needs L % 2**levels == 0"

    # Layout: channels-last so C sits on the 128-lane axis inside the kernel.
    y_blc = jnp.transpose(y, (0, 2, 1))                          # (B, L, C)

    # Host-side constant folding: (scale / L) into w1; pre-transpose weights.
    w1_eff = (w1 * scale).T / float(L)                           # (C, Cr)
    w2_t = w2.T                                                  # (Cr, C)
    del b1  # exactly cancelled by the BN batch-mean subtraction

    def full_spec(shape):
        return pl.BlockSpec(shape, lambda i, _n=len(shape): (0,) * _n)

    return pl.pallas_call(
        sfp_kernel,
        out_shape=jax.ShapeDtypeStruct((B, C), jnp.float32),
        grid=(1,),
        in_specs=[full_spec(y_blc.shape), full_spec(w1_eff.shape),
                  full_spec(gamma.shape), full_spec(beta.shape),
                  full_spec(w2_t.shape), full_spec(b2.shape)],
        out_specs=full_spec((B, C)),
        compiler_params=pltpu.CompilerParams(
            dimension_semantics=("arbitrary",)),
    )(y_blc, w1_eff, gamma, beta, w2_t, b2)


def sfp_reference(y, scale, w1, b1, gamma, beta, w2, b2):
    # Original (unfolded) formulation, for validation.
    z = jnp.mean(y, axis=2) * scale
    h = z @ w1.T + b1
    mu = jnp.mean(h, axis=0, keepdims=True)
    var = jnp.mean((h - mu) ** 2, axis=0, keepdims=True)
    h = (h - mu) / jnp.sqrt(var + 1e-5) * gamma + beta
    h = jnp.maximum(h, 0.0)
    return h @ w2.T + b2


if __name__ == "__main__":
    # Small shapes consistent with the module: gate_channel=48 (divisible by 3
    # chunks and reduction_ratio=16 -> hidden=3), L=16 (divisible by 2**3).
    B, C, L = 4, 48, 16
    levels = 3
    reduction_ratio = 16
    Cr = C // reduction_ratio

    key = jax.random.PRNGKey(0)
    k_y, k_w1, k_b1, k_g, k_bt, k_w2, k_b2 = jax.random.split(key, 7)

    y = jax.random.normal(k_y, (B, C, L), dtype=jnp.float32)

    # Per-channel wavelet scale: channels of chunk i (i = 1..3) get sqrt(2)**i.
    chunk = C // levels
    scale = jnp.concatenate(
        [jnp.full((chunk,), jnp.sqrt(2.0) ** i, dtype=jnp.float32)
         for i in range(1, levels + 1)]
    ).reshape(1, C)

    # Deterministic synthetic parameters (shapes follow nn.Linear / BatchNorm1d).
    w1 = jax.random.normal(k_w1, (Cr, C), dtype=jnp.float32) * 0.1
    b1 = jax.random.normal(k_b1, (1, Cr), dtype=jnp.float32) * 0.1
    gamma = 1.0 + 0.1 * jax.random.normal(k_g, (1, Cr), dtype=jnp.float32)
    beta = 0.1 * jax.random.normal(k_bt, (1, Cr), dtype=jnp.float32)
    w2 = jax.random.normal(k_w2, (C, Cr), dtype=jnp.float32) * 0.1
    b2 = jax.random.normal(k_b2, (1, C), dtype=jnp.float32) * 0.1

    out = sfp_forward(y, scale, w1, b1, gamma, beta, w2, b2, levels=levels)
    out = jax.block_until_ready(out)

    ref = sfp_reference(y, scale, w1, b1, gamma, beta, w2, b2)
    assert out.shape == (B, C)
    assert jnp.allclose(out, ref, rtol=1e-4, atol=1e-4)

    print("KERNEL_OK")
</pallas_src>

<mosaic_0001>
module attributes {stable_mosaic.version = 11 : i64} {
  func.func @sfp_kernel(%arg0: i32, %arg1: memref<4x16x48xf32, #tpu.memory_space<vmem>>, %arg2: memref<48x3xf32, #tpu.memory_space<vmem>>, %arg3: memref<1x3xf32, #tpu.memory_space<vmem>>, %arg4: memref<1x3xf32, #tpu.memory_space<vmem>>, %arg5: memref<3x48xf32, #tpu.memory_space<vmem>>, %arg6: memref<1x48xf32, #tpu.memory_space<vmem>>, %arg7: memref<4x48xf32, #tpu.memory_space<vmem>>) attributes {dimension_semantics = [#tpu.dimension_semantics<arbitrary>], iteration_bounds = array<i64: 1>, scalar_prefetch = 0 : i64, scratch_operands = 0 : i64, tpu.core_type = #tpu.core_type<tc>, window_params = [{pipeline_mode = #tpu.pipeline_mode<synchronous>, transform_indices = @transform_0, window_bounds = array<i64: 4, 16, 48>}, {pipeline_mode = #tpu.pipeline_mode<synchronous>, transform_indices = @transform_1, window_bounds = array<i64: 48, 3>}, {pipeline_mode = #tpu.pipeline_mode<synchronous>, transform_indices = @transform_2, window_bounds = array<i64: 1, 3>}, {pipeline_mode = #tpu.pipeline_mode<synchronous>, transform_indices = @transform_3, window_bounds = array<i64: 1, 3>}, {pipeline_mode = #tpu.pipeline_mode<synchronous>, transform_indices = @transform_4, window_bounds = array<i64: 3, 48>}, {pipeline_mode = #tpu.pipeline_mode<synchronous>, transform_indices = @transform_5, window_bounds = array<i64: 1, 48>}, {pipeline_mode = #tpu.pipeline_mode<synchronous>, transform_indices = @transform_6, window_bounds = array<i64: 4, 48>}]} {
    %c0 = arith.constant 0 : index
    %c0_0 = arith.constant 0 : index
    %c0_1 = arith.constant 0 : index
    %0 = vector.load %arg1[%c0, %c0_0, %c0_1] : memref<4x16x48xf32, #tpu.memory_space<vmem>>, vector<4x16x48xf32>
    %cst = arith.constant dense<0.000000e+00> : vector<4x48xf32>
    %1 = vector.multi_reduction <add>, %0, %cst [1] : vector<4x16x48xf32> to vector<4x48xf32>
    %c0_2 = arith.constant 0 : index
    %c0_3 = arith.constant 0 : index
    %2 = vector.load %arg2[%c0_2, %c0_3] : memref<48x3xf32, #tpu.memory_space<vmem>>, vector<48x3xf32>
    %cst_4 = arith.constant dense<0.000000e+00> : vector<4x3xf32>
    %3 = tpu.matmul %1, %2, %cst_4 {dimension_numbers = #tpu.dot_dimension_numbers<[1], [0], [0], [1], [0, 0, 1, 1], [], []>} : vector<4x48xf32>, vector<48x3xf32>, vector<4x3xf32> -> vector<4x3xf32>
    %cst_5 = arith.constant dense<0.000000e+00> : vector<3xf32>
    %4 = vector.multi_reduction <add>, %3, %cst_5 [0] : vector<4x3xf32> to vector<3xf32>
    %5 = vector.shape_cast %4 : vector<3xf32> to vector<1x3xf32>
    %cst_6 = arith.constant 4.000000e+00 : f32
    %6 = vector.broadcast %cst_6 : f32 to vector<1x3xf32>
    %7 = arith.divf %5, %6 : vector<1x3xf32>
    %8 = vector.broadcast %7 : vector<1x3xf32> to vector<4x3xf32>
    %9 = arith.subf %3, %8 : vector<4x3xf32>
    %10 = arith.mulf %9, %9 : vector<4x3xf32>
    %cst_7 = arith.constant dense<0.000000e+00> : vector<3xf32>
    %11 = vector.multi_reduction <add>, %10, %cst_7 [0] : vector<4x3xf32> to vector<3xf32>
    %12 = vector.shape_cast %11 : vector<3xf32> to vector<1x3xf32>
    %cst_8 = arith.constant 4.000000e+00 : f32
    %13 = vector.broadcast %cst_8 : f32 to vector<1x3xf32>
    %14 = arith.divf %12, %13 : vector<1x3xf32>
    %cst_9 = arith.constant 9.99999974E-6 : f32
    %15 = vector.broadcast %cst_9 : f32 to vector<1x3xf32>
    %16 = arith.addf %14, %15 : vector<1x3xf32>
    %17 = math.rsqrt %16 : vector<1x3xf32>
    %c0_10 = arith.constant 0 : index
    %c0_11 = arith.constant 0 : index
    %18 = vector.load %arg3[%c0_10, %c0_11] : memref<1x3xf32, #tpu.memory_space<vmem>>, vector<1x3xf32>
    %19 = arith.mulf %17, %18 : vector<1x3xf32>
    %c0_12 = arith.constant 0 : index
    %c0_13 = arith.constant 0 : index
    %20 = vector.load %arg4[%c0_12, %c0_13] : memref<1x3xf32, #tpu.memory_space<vmem>>, vector<1x3xf32>
    %21 = arith.mulf %7, %19 : vector<1x3xf32>
    %22 = arith.subf %20, %21 : vector<1x3xf32>
    %23 = vector.broadcast %19 : vector<1x3xf32> to vector<4x3xf32>
    %24 = arith.mulf %3, %23 : vector<4x3xf32>
    %25 = vector.broadcast %22 : vector<1x3xf32> to vector<4x3xf32>
    %26 = arith.addf %24, %25 : vector<4x3xf32>
    %cst_14 = arith.constant 0.000000e+00 : f32
    %27 = vector.broadcast %cst_14 : f32 to vector<4x3xf32>
    %28 = arith.maximumf %26, %27 : vector<4x3xf32>
    %c0_15 = arith.constant 0 : index
    %c0_16 = arith.constant 0 : index
    %29 = vector.load %arg5[%c0_15, %c0_16] : memref<3x48xf32, #tpu.memory_space<vmem>>, vector<3x48xf32>
    %cst_17 = arith.constant dense<0.000000e+00> : vector<4x48xf32>
    %30 = tpu.matmul %28, %29, %cst_17 {dimension_numbers = #tpu.dot_dimension_numbers<[1], [0], [0], [1], [0, 0, 1, 1], [], []>} : vector<4x3xf32>, vector<3x48xf32>, vector<4x48xf32> -> vector<4x48xf32>
    %c0_18 = arith.constant 0 : index
    %c0_19 = arith.constant 0 : index
    %31 = vector.load %arg6[%c0_18, %c0_19] : memref<1x48xf32, #tpu.memory_space<vmem>>, vector<1x48xf32>
    %32 = vector.broadcast %31 : vector<1x48xf32> to vector<4x48xf32>
    %33 = arith.addf %30, %32 : vector<4x48xf32>
    %c0_20 = arith.constant 0 : index
    %c0_21 = arith.constant 0 : index
    %34 = vector.load %arg7[%c0_20, %c0_21] : memref<4x48xf32, #tpu.memory_space<vmem>>, vector<4x48xf32>
    tpu.vector_store %arg7[%c0_20, %c0_21], %33 {strides = array<i32>} : memref<4x48xf32, #tpu.memory_space<vmem>>, vector<4x48xf32>,
    return
  }
  func.func @transform_0(%arg0: i32) -> (i32, i32, i32) {
    %c0_i32 = arith.constant 0 : i32
    %c0_i32_0 = arith.constant 0 : i32
    %c0_i32_1 = arith.constant 0 : i32
    %c0_i32_2 = arith.constant 0 : i32
    return %c0_i32, %c0_i32_0, %c0_i32_1 : i32, i32, i32
  }
  func.func @transform_1(%arg0: i32) -> (i32, i32) {
    %c0_i32 = arith.constant 0 : i32
    %c0_i32_0 = arith.constant 0 : i32
    %c0_i32_1 = arith.constant 0 : i32
    return %c0_i32, %c0_i32_0 : i32, i32
  }
  func.func @transform_2(%arg0: i32) -> (i32, i32) {
    %c0_i32 = arith.constant 0 : i32
    %c0_i32_0 = arith.constant 0 : i32
    %c0_i32_1 = arith.constant 0 : i32
    return %c0_i32, %c0_i32_0 : i32, i32
  }
  func.func @transform_3(%arg0: i32) -> (i32, i32) {
    %c0_i32 = arith.constant 0 : i32
    %c0_i32_0 = arith.constant 0 : i32
    %c0_i32_1 = arith.constant 0 : i32
    return %c0_i32, %c0_i32_0 : i32, i32
  }
  func.func @transform_4(%arg0: i32) -> (i32, i32) {
    %c0_i32 = arith.constant 0 : i32
    %c0_i32_0 = arith.constant 0 : i32
    %c0_i32_1 = arith.constant 0 : i32
    return %c0_i32, %c0_i32_0 : i32, i32
  }
  func.func @transform_5(%arg0: i32) -> (i32, i32) {
    %c0_i32 = arith.constant 0 : i32
    %c0_i32_0 = arith.constant 0 : i32
    %c0_i32_1 = arith.constant 0 : i32
    return %c0_i32, %c0_i32_0 : i32, i32
  }
  func.func @transform_6(%arg0: i32) -> (i32, i32) {
    %c0_i32 = arith.constant 0 : i32
    %c0_i32_0 = arith.constant 0 : i32
    %c0_i32_1 = arith.constant 0 : i32
    return %c0_i32, %c0_i32_0 : i32, i32
  }
}

</mosaic_0001>

<llo_original>
// kernel: tpu_custom_call.1
$region0: #{tpu_custom_call.1}
  #allocation0 [shape = 'u32[]', space=smem, size = 0x4, offset = 0x4, fixed_abs, tag = 'smem constant byte address 0x4 - core index']
  #allocation1 [shape = 'u32[144,128]{1,0:T(1,128)}', space=vmem, size = 0x12000, scoped, tag = 'internal scratch']
  %s0 = inlined_call_operand.hbm [shape: f32[4,16,48], index: 0, kind: input, shape index: {}]
  %s1 = inlined_call_operand.vmem [shape: f32[48,3], index: 1, kind: input, shape index: {}]
  %s2 = inlined_call_operand.vmem [shape: f32[1,3], index: 2, kind: input, shape index: {}]
  %s3 = inlined_call_operand.vmem [shape: f32[1,3], index: 3, kind: input, shape index: {}]
  %s4 = inlined_call_operand.vmem [shape: f32[3,48], index: 4, kind: input, shape index: {}]
  %s5 = inlined_call_operand.vmem [shape: f32[1,48], index: 5, kind: input, shape index: {}]
  %s6 = inlined_call_operand.hbm [shape: f32[4,48], index: 6, kind: output, shape index: {}]
  %s7 = sld [smem:[#allocation0]]
  $region38: #{tpu_custom_call.1} parent=0
    _
  %s9 = ssub.s32 1, %s7
  %s10 = scalar_select 0, %s9, %s7
  $region1: #{tpu_custom_call.1} parent=0
    #allocation2 [shape = 'u8[32768]{0}', space=vmem, size = 0x8000, scoped, tag = 'input window, operand 0, single buffered']
    #allocation3 [shape = 's32[1]{0}', space=sflag, size = 0x4, scoped, tag = 'scoped memory for tpu_custom_call.1']
    #allocation4 [shape = 's32[1]{0}', space=sflag, size = 0x4, scoped, tag = 'scoped memory for tpu_custom_call.1']
    #allocation5 [shape = 'u8[2048]{0}', space=vmem, size = 0x800, scoped, tag = 'output window, operand 0, single buffered']
    %11 = vsyncpa [#allocation3], 0
    %12 = vsyncpa [#allocation4], 0
    // Predicated region
    $region2: #{tpu_custom_call.1} parent=1 // pred_check
      _
    $region3: #{tpu_custom_call.1} parent=1 // pred_check_branch
      %14 = sbr.rel (0) target = $region5
    $region4: #{tpu_custom_call.1} parent=1 // pred_region
      %s16 = ssub.s32 1024, 1024
      %17 = vsyncadd [#allocation3], %s16
      %s18 = sshll.u32 [#allocation2], 4
      %s19 = int_to_ptr.vmem [resolvable:$true] %s18
      %24 = dma.hbm_to_vmem [thread:$0]  %s0, 1024, %s19, [#allocation3], 128, 128, 8
    $region5: #{tpu_custom_call.1} parent=1 // pred_fallthru
      _
    // Predicated region
    $region6: #{tpu_custom_call.1} parent=1 // pred_check
      _
    $region7: #{tpu_custom_call.1} parent=1 // pred_check_branch
      %26 = sbr.rel (0) target = $region9
    $region8: #{tpu_custom_call.1} parent=1 // pred_region
      _
    $region9: #{tpu_custom_call.1} parent=1 // pred_fallthru
      _
    // Predicated region
    $region10: #{tpu_custom_call.1} parent=1 // pred_check
      _
    $region11: #{tpu_custom_call.1} parent=1 // pred_check_branch
      %28 = sbr.rel (0) target = $region13
    $region12: #{tpu_custom_call.1} parent=1 // pred_region
      _
    $region13: #{tpu_custom_call.1} parent=1 // pred_fallthru
      _
    // Predicated region
    $region14: #{tpu_custom_call.1} parent=1 // pred_check
      _
    $region15: #{tpu_custom_call.1} parent=1 // pred_check_branch
      %30 = sbr.rel (0) target = $region17
    $region16: #{tpu_custom_call.1} parent=1 // pred_region
      _
    $region17: #{tpu_custom_call.1} parent=1 // pred_fallthru
      _
    // Predicated region
    $region18: #{tpu_custom_call.1} parent=1 // pred_check
      _
    $region19: #{tpu_custom_call.1} parent=1 // pred_check_branch
      %32 = sbr.rel (0) target = $region21
    $region20: #{tpu_custom_call.1} parent=1 // pred_region
      _
    $region21: #{tpu_custom_call.1} parent=1 // pred_fallthru
      _
    // Predicated region
    $region22: #{tpu_custom_call.1} parent=1 // pred_check
      _
    $region23: #{tpu_custom_call.1} parent=1 // pred_check_branch
      %34 = sbr.rel (0) target = $region25
    $region24: #{tpu_custom_call.1} parent=1 // pred_region
      _
    $region25: #{tpu_custom_call.1} parent=1 // pred_fallthru
      _
    // Predicated region
    $region26: #{tpu_custom_call.1} parent=1 // pred_check
      _
    $region27: #{tpu_custom_call.1} parent=1 // pred_check_branch
      %36 = sbr.rel (0) target = $region29
    $region28: #{tpu_custom_call.1} parent=1 // pred_region
      %37 = dma.done [#allocation3], 1024
    $region29: #{tpu_custom_call.1} parent=1 // pred_fallthru
      _
    %v38 = vld [vmem:[#allocation2] sm:$0xff]
    %v39 = vld [vmem:[#allocation2 + $0x8] sm:$0xff]
    %v40 = vld [vmem:[#allocation2 + $0x10] sm:$0xff]
    %v41 = vld [vmem:[#allocation2 + $0x18] sm:$0xff]
    %v42 = vld [vmem:[#allocation2 + $0x20] sm:$0xff]
    %v43 = vld [vmem:[#allocation2 + $0x28] sm:$0xff]
    %v44 = vld [vmem:[#allocation2 + $0x30] sm:$0xff]
    %v45 = vld [vmem:[#allocation2 + $0x38] sm:$0xff]
    %vm46 = vcmask 392192
    %v47 = vsel %vm46, %v38, 0.0
    %v48 = vsel %vm46, %v39, 0.0
    %v49 = vadd.f32 %v47, %v48
    %v50 = vrot.slane %v49, 4
    %v51 = vadd.f32 %v49, %v50
    %v52 = vrot.slane %v51, 2
    %v53 = vadd.f32 %v51, %v52
    %v54 = vrot.slane %v53, 1
    %v55 = vadd.f32 %v53, %v54
    %v56 = vsel %vm46, %v40, 0.0
    %v57 = vsel %vm46, %v41, 0.0
    %v58 = vadd.f32 %v56, %v57
    %v59 = vrot.slane %v58, 4
    %v60 = vadd.f32 %v58, %v59
    %v61 = vrot.slane %v60, 2
    %v62 = vadd.f32 %v60, %v61
    %v63 = vrot.slane %v62, 1
    %v64 = vadd.f32 %v62, %v63
    %v65 = vsel %vm46, %v42, 0.0
    %v66 = vsel %vm46, %v43, 0.0
    %v67 = vadd.f32 %v65, %v66
    %v68 = vrot.slane %v67, 4
    %v69 = vadd.f32 %v67, %v68
    %v70 = vrot.slane %v69, 2
    %v71 = vadd.f32 %v69, %v70
    %v72 = vrot.slane %v71, 1
    %v73 = vadd.f32 %v71, %v72
    %v74 = vsel %vm46, %v44, 0.0
    %v75 = vsel %vm46, %v45, 0.0
    %v76 = vadd.f32 %v74, %v75
    %v77 = vrot.slane %v76, 4
    %v78 = vadd.f32 %v76, %v77
    %v79 = vrot.slane %v78, 2
    %v80 = vadd.f32 %v78, %v79
    %v81 = vrot.slane %v80, 1
    %v82 = vadd.f32 %v80, %v81
    %v83 = vld [vmem:[%s1] sm:$0xff]
    %v84 = vld [vmem:[%s1 + $0x8] sm:$0xff]
    %v85 = vld [vmem:[%s1 + $0x10] sm:$0xff]
    %v86 = vld [vmem:[%s1 + $0x18] sm:$0xff]
    %v87 = vld [vmem:[%s1 + $0x20] sm:$0xff]
    %v88 = vld [vmem:[%s1 + $0x28] sm:$0xff]
    %vm93 = vcmask 1041409
    %v94 = vsel %vm93, %v64, %v55
    %vm95 = vcmask 1042434
    %v96 = vsel %vm95, %v73, %v94
    %vm97 = vcmask 1043459
    %v98 = vsel %vm97, %v82, %v96
    %v99 = vsel %vm46, %v98, 0
    %101 = vmatprep.subr.mxu0 0.0
    %102 = vmatpush1.msra.mxu0 %v83
    %103 = vmatprep.subr.mxu0 0.0
    %104 = vmatpush1.msra.mxu0 %v84
    %105 = vmatprep.subr.mxu0 0.0
    %106 = vmatpush1.msra.mxu0 %v85
    %107 = vmatprep.subr.mxu0 0.0
    %108 = vmatpush1.msra.mxu0 %v86
    %109 = vmatprep.subr.mxu0 0.0
    %110 = vmatpush1.msra.mxu0 %v87
    %111 = vmatprep.subr.mxu0 0.0
    %112 = vmatpush1.msra.mxu0 %v88
    %113 = vmatprep.subr.mxu0 0.0
    %114 = vmatpush1.msra.mxu0 0.0
    %115 = vmatprep.subr.mxu0 0.0
    %116 = vmatpush1.msra.mxu0 0.0
    %117 = vmatprep.subr.mxu0 0.0
    %118 = vmatpush1.msra.mxu0 0.0
    %119 = vmatprep.subr.mxu0 0.0
    %120 = vmatpush1.msra.mxu0 0.0
    %121 = vmatprep.subr.mxu0 0.0
    %122 = vmatpush1.msra.mxu0 0.0
    %123 = vmatprep.subr.mxu0 0.0
    %124 = vmatpush1.msra.mxu0 0.0
    %125 = vmatprep.subr.mxu0 0.0
    %126 = vmatpush1.msra.mxu0 0.0
    %127 = vmatprep.subr.mxu0 0.0
    %128 = vmatpush1.msra.mxu0 0.0
    %129 = vmatprep.subr.mxu0 0.0
    %130 = vmatpush1.msra.mxu0 0.0
    %131 = vmatprep.subr.mxu0 0.0
    %132 = vmatpush1.msra.mxu0 0.0
    %133 = vmatprep.subr.mxu0 0.0
    %134 = vmatpush1.msra.mxu0 0.0
    %135 = vmatprep.subr.mxu0 0.0
    %136 = vmatpush1.msra.mxu0 0.0
    %137 = vmatprep.subr.mxu0 0.0
    %138 = vmatpush1.msra.mxu0 0.0
    %139 = vmatprep.subr.mxu0 0.0
    %140 = vmatpush1.msra.mxu0 0.0
    %141 = vmatprep.subr.mxu0 0.0
    %142 = vmatpush1.msra.mxu0 0.0
    %143 = vmatprep.subr.mxu0 0.0
    %144 = vmatpush1.msra.mxu0 0.0
    %145 = vmatprep.subr.mxu0 0.0
    %146 = vmatpush1.msra.mxu0 0.0
    %147 = vmatprep.subr.mxu0 0.0
    %148 = vmatpush1.msra.mxu0 0.0
    %149 = vmatprep.subr.mxu0 0.0
    %150 = vmatpush1.msra.mxu0 0.0
    %151 = vmatprep.subr.mxu0 0.0
    %152 = vmatpush1.msra.mxu0 0.0
    %153 = vmatprep.subr.mxu0 0.0
    %154 = vmatpush1.msra.mxu0 0.0
    %155 = vmatprep.subr.mxu0 0.0
    %156 = vmatpush1.msra.mxu0 0.0
    %157 = vmatprep.subr.mxu0 0.0
    %158 = vmatpush1.msra.mxu0 0.0
    %159 = vmatprep.subr.mxu0 0.0
    %160 = vmatpush1.msra.mxu0 0.0
    %161 = vmatprep.subr.mxu0 0.0
    %162 = vmatpush1.msra.mxu0 0.0
    %163 = vmatprep.subr.mxu0 0.0
    %164 = vmatpush1.msra.mxu0 0.0
    %165 = vmatprep.mubr.f32.mxu0 0.0
    %166 = vmatmul.mubr.f32.gmra.mrb[0].mxu0 %v99
    %v167 = vpop.f32.mrb[0].mxu0
    %v168 = vadd.f32 0.0, %v167
    %v169 = vpop.f32.mrb[0].mxu0
    %170 = vdwg.mxu0
    %vm171 = vcmask 19456
    %v172 = vsel %vm171, %v168, 0.0
    %v173 = vrot.slane %v172, 4
    %v174 = vadd.f32 %v172, %v173
    %v175 = vrot.slane %v174, 2
    %v176 = vadd.f32 %v174, %v175
    %v177 = vrot.slane %v176, 1
    %v178 = vadd.f32 %v176, %v177
    %v179 = vrcp.pop 4.0
    %v180 = vmul.f32 %v178, %v179
    %v181 = vsub.f32 %v168, %v180
    %v182 = vmul.f32 %v181, %v181
    %v183 = vsel %vm171, %v182, 0.0
    %v184 = vrot.slane %v183, 4
    %v185 = vadd.f32 %v183, %v184
    %v186 = vrot.slane %v185, 2
    %v187 = vadd.f32 %v185, %v186
    %v188 = vrot.slane %v187, 1
    %v189 = vadd.f32 %v187, %v188
    %v190 = vmul.f32 %v189, %v179
    %v191 = vadd.f32 %v190, 1e-05
    %v192 = vrsqrt.pop %v191
    %v193 = vld [vmem:[%s2] sm:$0x1]
    %v194 = vmul.f32 %v192, %v193
    %v195 = vld [vmem:[%s3] sm:$0x1]
    %v196 = vmul.f32 %v180, %v194
    %v197 = vsub.f32 %v195, %v196
    %v198 = vlaneseq
    %v199 = vshrl.u32 %v198, 7
    %v200 = vsub.s32 0, %v199
    %v201 = vrot.slane %v194, %v200
    %v202 = vmul.f32 %v168, %v201
    %v204 = vlaneseq
    %v205 = vshrl.u32 %v204, 7
    %v206 = vsub.s32 0, %v205
    %v207 = vrot.slane %v197, %v206
    %v209 = vadd.f32 %v202, %v207
    %v210 = vmax.f32 %v209, 0.0
    %v211 = vld [vmem:[%s4] sm:$0x7]
    %v212 = vld [vmem:[%s5] sm:$0x1]
    %v214 = vlaneseq
    %v215 = vshrl.u32 %v214, 7
    %v216 = vsub.s32 0, %v215
    %v217 = vrot.slane %v212, %v216
    %vm219 = vcmask 23552
    %v221 = vsel %vm219, %v210, 0
    %vm223 = vcmask 1042432
    %v225 = vsel %vm223, %v211, 0
    %227 = vmatprep.subr.mxu0 0.0
    %228 = vmatpush1.msra.mxu0 %v225
    %229 = vmatprep.subr.mxu0 0.0
    %230 = vmatpush1.msra.mxu0 0.0
    %231 = vmatprep.subr.mxu0 0.0
    %232 = vmatpush1.msra.mxu0 0.0
    %233 = vmatprep.subr.mxu0 0.0
    %234 = vmatpush1.msra.mxu0 0.0
    %235 = vmatprep.subr.mxu0 0.0
    %236 = vmatpush1.msra.mxu0 0.0
    %237 = vmatprep.subr.mxu0 0.0
    %238 = vmatpush1.msra.mxu0 0.0
    %239 = vmatprep.subr.mxu0 0.0
    %240 = vmatpush1.msra.mxu0 0.0
    %241 = vmatprep.subr.mxu0 0.0
    %242 = vmatpush1.msra.mxu0 0.0
    %243 = vmatprep.subr.mxu0 0.0
    %244 = vmatpush1.msra.mxu0 0.0
    %245 = vmatprep.subr.mxu0 0.0
    %246 = vmatpush1.msra.mxu0 0.0
    %247 = vmatprep.subr.mxu0 0.0
    %248 = vmatpush1.msra.mxu0 0.0
    %249 = vmatprep.subr.mxu0 0.0
    %250 = vmatpush1.msra.mxu0 0.0
    %251 = vmatprep.subr.mxu0 0.0
    %252 = vmatpush1.msra.mxu0 0.0
    %253 = vmatprep.subr.mxu0 0.0
    %254 = vmatpush1.msra.mxu0 0.0
    %255 = vmatprep.subr.mxu0 0.0
    %256 = vmatpush1.msra.mxu0 0.0
    %257 = vmatprep.subr.mxu0 0.0
    %258 = vmatpush1.msra.mxu0 0.0
    %259 = vmatprep.subr.mxu0 0.0
    %260 = vmatpush1.msra.mxu0 0.0
    %261 = vmatprep.subr.mxu0 0.0
    %262 = vmatpush1.msra.mxu0 0.0
    %263 = vmatprep.subr.mxu0 0.0
    %264 = vmatpush1.msra.mxu0 0.0
    %265 = vmatprep.subr.mxu0 0.0
    %266 = vmatpush1.msra.mxu0 0.0
    %267 = vmatprep.subr.mxu0 0.0
    %268 = vmatpush1.msra.mxu0 0.0
    %269 = vmatprep.subr.mxu0 0.0
    %270 = vmatpush1.msra.mxu0 0.0
    %271 = vmatprep.subr.mxu0 0.0
    %272 = vmatpush1.msra.mxu0 0.0
    %273 = vmatprep.subr.mxu0 0.0
    %274 = vmatpush1.msra.mxu0 0.0
    %275 = vmatprep.subr.mxu0 0.0
    %276 = vmatpush1.msra.mxu0 0.0
    %277 = vmatprep.subr.mxu0 0.0
    %278 = vmatpush1.msra.mxu0 0.0
    %279 = vmatprep.subr.mxu0 0.0
    %280 = vmatpush1.msra.mxu0 0.0
    %281 = vmatprep.subr.mxu0 0.0
    %282 = vmatpush1.msra.mxu0 0.0
    %283 = vmatprep.subr.mxu0 0.0
    %284 = vmatpush1.msra.mxu0 0.0
    %285 = vmatprep.subr.mxu0 0.0
    %286 = vmatpush1.msra.mxu0 0.0
    %287 = vmatprep.subr.mxu0 0.0
    %288 = vmatpush1.msra.mxu0 0.0
    %289 = vmatprep.subr.mxu0 0.0
    %290 = vmatpush1.msra.mxu0 0.0
    %291 = vmatprep.mubr.f32.mxu0 0.0
    %292 = vmatmul.mubr.f32.gmra.mrb[0].mxu0 %v221
    %v293 = vpop.f32.mrb[0].mxu0
    %v294 = vadd.f32 %v217, %v293
    %v295 = vpop.f32.mrb[0].mxu0
    %296 = vdwg.mxu0
    %vm297 = vcmask 388096
    %298 = vst.msk [vmem:[#allocation5] sm:$0xf] %vm297, %v294
    // Predicated region
    $region30: #{tpu_custom_call.1} parent=1 // pred_check
      _
    $region31: #{tpu_custom_call.1} parent=1 // pred_check_branch
      %300 = sbr.rel (0) target = $region33
    $region32: #{tpu_custom_call.1} parent=1 // pred_region
      %s302 = ssub.s32 64, 64
      %303 = vsyncadd [#allocation4], %s302
      %s305 = sshll.u32 [#allocation5], 4
      %s306 = int_to_ptr.vmem [resolvable:$true] %s305
      %308 = dma.vmem_to_hbm [thread:$0]  %s306, 64, %s6, [#allocation4]
    $region33: #{tpu_custom_call.1} parent=1 // pred_fallthru
      _
    // Predicated region
    $region34: #{tpu_custom_call.1} parent=1 // pred_check
      _
    $region35: #{tpu_custom_call.1} parent=1 // pred_check_branch
      %310 = sbr.rel (0) target = $region37
    $region36: #{tpu_custom_call.1} parent=1 // pred_region
      %311 = dma.done [#allocation4], 64
    $region37: #{tpu_custom_call.1} parent=1 // pred_fallthru
      _
    %312 = vsyncpa [#allocation3], 1
    %313 = vsyncpa [#allocation4], 1

</llo_original>
